<compile_context>
chip_gen: v7x
topology: tpu7x:2x2x1
jax: 0.10.0
libtpu: 0.0.40
codegen_flags: <defaults>
</compile_context>

<pallas_src>
import numpy as np
import jax
import jax.numpy as jnp
from jax.experimental import pallas as pl
from jax.experimental.pallas import tpu as pltpu

# float32 eps used by torch.distributions for probs->logits clamping.
_F32_EPS = float(np.finfo(np.float32).eps)
# clamp(p, eps, 1-eps) in logit space == clip(logits, -L, +L), L = logit(1-eps).
_LOGIT_CLAMP = float(np.log1p(-_F32_EPS) - np.log(_F32_EPS))  # ~15.9424


def _round_up(a, m):
    return ((a + m - 1) // m) * m


def bernoulli_decoder_kernel(z_ref, x_ref, w1_ref, b1_ref, w2_ref, b2_ref,
                             probs_ref, nll_ref):
    # --- decoder model: Linear -> ReLU -> Linear (bf16 MXU operands, f32 acc) ---
    h = jnp.dot(z_ref[...], w1_ref[...], preferred_element_type=jnp.float32)
    h = jnp.maximum(h + b1_ref[...], 0.0)                              # ReLU (f32)
    logits = jnp.dot(h.astype(jnp.bfloat16), w2_ref[...],
                     preferred_element_type=jnp.float32) + b2_ref[...]

    # --- Bernoulli NLL straight from logits (== torch's eps-clamped path) ---
    lc = jnp.clip(logits, -_LOGIT_CLAMP, _LOGIT_CLAMP)
    softplus = jnp.maximum(lc, 0.0) + jnp.log1p(jnp.exp(-jnp.abs(lc)))  # stable softplus

    # probs_x = sigmoid(logits); reuse softplus: exp(lc - softplus(lc)) == sigmoid(lc).
    # Post-sigmoid clamp(0,1) is a no-op and is dropped.
    probs_ref[...] = jnp.exp(lc - softplus).astype(probs_ref.dtype)

    # NOTE: x is assumed to be (near-)binary targets; it is streamed as bf16
    # (exact for {0,1}). Soft targets would lose ~3 decimal digits here.
    x = x_ref[...].astype(jnp.float32)
    nll_ref[...] = (softplus - x * lc).astype(nll_ref.dtype)


def bernoulli_decoder_forward(z, x, w1, b1, w2, b2, *, tile_b=None):
    """Returns (probs_x [bfloat16], neg_logpx_z [float32]), both shaped like x."""
    B, latent = z.shape
    hidden, out_dim = w2.shape
    assert w1.shape == (latent, hidden) and x.shape == (B, out_dim)

    # --- batch tiling: default 512 rows, multiple of 32, pad remainder ---
    if tile_b is None:
        tile_b = 512
    tile_b = max(32, min(int(tile_b), _round_up(B, 32)))
    tile_b = _round_up(tile_b, 32)
    B_pad = _round_up(B, tile_b)
    grid = (B_pad // tile_b,)

    # bf16 MXU operands (halves input DMA bytes); biases stay f32.
    z_bf = z.astype(jnp.bfloat16)
    x_bf = x.astype(jnp.bfloat16)                 # x is {0,1}: exact in bf16
    if B_pad != B:
        pad = B_pad - B
        z_bf = jnp.pad(z_bf, ((0, pad), (0, 0)))
        x_bf = jnp.pad(x_bf, ((0, pad), (0, 0)))
    w1_bf = w1.astype(jnp.bfloat16)
    w2_bf = w2.astype(jnp.bfloat16)
    b1_f = b1.astype(jnp.float32).reshape(1, hidden)
    b2_f = b2.astype(jnp.float32).reshape(1, out_dim)

    # --- VMEM budget: weights single-buffered, streamed tiles double-buffered ---
    bytes_weights = (latent * hidden + hidden * out_dim) * 2 + (hidden + out_dim) * 4
    bytes_per_row = latent * 2 + out_dim * 2 + out_dim * 2 + out_dim * 4
    vmem_needed = bytes_weights + 2 * tile_b * bytes_per_row
    vmem_limit = int(min(max(2 * vmem_needed + (8 << 20), 32 << 20), 64 << 20))

    flops = 2 * B_pad * (latent * hidden + hidden * out_dim) + 8 * B_pad * out_dim
    transcendentals = 3 * B_pad * out_dim          # exp + log1p (softplus) + exp (probs)
    bytes_accessed = (z_bf.size * 2 + x_bf.size * 2 + w1_bf.size * 2 +
                      w2_bf.size * 2 + b1_f.size * 4 + b2_f.size * 4 +
                      B_pad * out_dim * 2 +        # probs (bf16)
                      B_pad * out_dim * 4)         # nll   (f32)

    resident = dict(pipeline_mode=pl.Buffered(1))  # weights: no double-buffering

    probs, nll = pl.pallas_call(
        bernoulli_decoder_kernel,
        out_shape=(jax.ShapeDtypeStruct((B_pad, out_dim), jnp.bfloat16),  # probs_x
                   jax.ShapeDtypeStruct((B_pad, out_dim), jnp.float32)),  # neg_logpx_z
        grid_spec=pltpu.PrefetchScalarGridSpec(
            num_scalar_prefetch=0,
            grid=grid,
            in_specs=[
                pl.BlockSpec((tile_b, latent), lambda i: (i, 0)),     # z: batch-tiled
                pl.BlockSpec((tile_b, out_dim), lambda i: (i, 0)),    # x: batch-tiled
                pl.BlockSpec((latent, hidden), lambda i: (0, 0), **resident),   # w1
                pl.BlockSpec((1, hidden), lambda i: (0, 0), **resident),         # b1
                pl.BlockSpec((hidden, out_dim), lambda i: (0, 0), **resident),   # w2
                pl.BlockSpec((1, out_dim), lambda i: (0, 0), **resident),        # b2
            ],
            out_specs=[
                pl.BlockSpec((tile_b, out_dim), lambda i: (i, 0)),    # probs_x
                pl.BlockSpec((tile_b, out_dim), lambda i: (i, 0)),    # neg_logpx_z
            ],
        ),
        compiler_params=pltpu.CompilerParams(
            dimension_semantics=("parallel",),                        # megacore sharding
            vmem_limit_bytes=vmem_limit),
        cost_estimate=pl.CostEstimate(flops=flops,
                                      transcendentals=transcendentals,
                                      bytes_accessed=bytes_accessed),
    )(z_bf, x_bf, w1_bf, b1_f, w2_bf, b2_f)

    if B_pad != B:
        probs = probs[:B]
        nll = nll[:B]
    return probs, nll


if __name__ == "__main__":
    # Small shapes; B=48 deliberately exercises the pad-to-tile remainder path.
    B, LATENT, HIDDEN, OUT = 48, 32, 128, 256

    key = jax.random.PRNGKey(0)
    kz, kx, k1, k2, k3, k4 = jax.random.split(key, 6)

    z = jax.random.normal(kz, (B, LATENT), jnp.float32)
    # Bernoulli observations (0/1), as expected by Bernoulli.log_prob.
    x = (jax.random.uniform(kx, (B, OUT), jnp.float32) < 0.5).astype(jnp.float32)

    w1 = jax.random.normal(k1, (LATENT, HIDDEN), jnp.float32) * 0.1
    b1 = jax.random.normal(k2, (1, HIDDEN), jnp.float32) * 0.01
    w2 = jax.random.normal(k3, (HIDDEN, OUT), jnp.float32) * 0.1
    b2 = jax.random.normal(k4, (1, OUT), jnp.float32) * 0.01

    probs_x, neg_logpx_z = bernoulli_decoder_forward(z, x, w1, b1, w2, b2)
    jax.block_until_ready((probs_x, neg_logpx_z))

    # Pure-JAX reference with the same bf16-operand / f32-accumulate math.
    zb, w1b, w2b = (a.astype(jnp.bfloat16) for a in (z, w1, w2))
    h_ref = jnp.maximum(jnp.dot(zb, w1b, preferred_element_type=jnp.float32) + b1, 0.0)
    logits_ref = jnp.dot(h_ref.astype(jnp.bfloat16), w2b,
                         preferred_element_type=jnp.float32) + b2
    p_ref = jax.nn.sigmoid(logits_ref)
    lc = jnp.clip(logits_ref, -_LOGIT_CLAMP, _LOGIT_CLAMP)
    nll_ref = jnp.maximum(lc, 0.0) + jnp.log1p(jnp.exp(-jnp.abs(lc))) - x * lc

    assert probs_x.shape == (B, OUT) and neg_logpx_z.shape == (B, OUT)
    assert jnp.allclose(probs_x.astype(jnp.float32), p_ref, atol=1e-2), \
        float(jnp.max(jnp.abs(probs_x.astype(jnp.float32) - p_ref)))
    assert jnp.allclose(neg_logpx_z, nll_ref, atol=5e-3), \
        float(jnp.max(jnp.abs(neg_logpx_z - nll_ref)))

    print("KERNEL_OK")
</pallas_src>

<mosaic_0001>
module attributes {stable_mosaic.version = 11 : i64} {
  func.func @bernoulli_decoder_kernel(%arg0: i32, %arg1: memref<64x32xbf16, #tpu.memory_space<vmem>>, %arg2: memref<64x256xbf16, #tpu.memory_space<vmem>>, %arg3: memref<32x128xbf16, #tpu.memory_space<vmem>>, %arg4: memref<1x128xf32, #tpu.memory_space<vmem>>, %arg5: memref<128x256xbf16, #tpu.memory_space<vmem>>, %arg6: memref<1x256xf32, #tpu.memory_space<vmem>>, %arg7: memref<64x256xbf16, #tpu.memory_space<vmem>>, %arg8: memref<64x256xf32, #tpu.memory_space<vmem>>) attributes {dimension_semantics = [#tpu.dimension_semantics<parallel>], iteration_bounds = array<i64: 1>, scalar_prefetch = 0 : i64, scratch_operands = 0 : i64, tpu.core_type = #tpu.core_type<tc>, window_params = [{transform_indices = @transform_0, window_bounds = array<i64: 64, 32>}, {transform_indices = @transform_1, window_bounds = array<i64: 64, 256>}, {pipeline_mode = #tpu.pipeline_mode<synchronous>, transform_indices = @transform_2, window_bounds = array<i64: 32, 128>}, {pipeline_mode = #tpu.pipeline_mode<synchronous>, transform_indices = @transform_3, window_bounds = array<i64: 1, 128>}, {pipeline_mode = #tpu.pipeline_mode<synchronous>, transform_indices = @transform_4, window_bounds = array<i64: 128, 256>}, {pipeline_mode = #tpu.pipeline_mode<synchronous>, transform_indices = @transform_5, window_bounds = array<i64: 1, 256>}, {transform_indices = @transform_6, window_bounds = array<i64: 64, 256>}, {transform_indices = @transform_7, window_bounds = array<i64: 64, 256>}]} {
    %c0 = arith.constant 0 : index
    %c0_0 = arith.constant 0 : index
    %0 = vector.load %arg1[%c0, %c0_0] : memref<64x32xbf16, #tpu.memory_space<vmem>>, vector<64x32xbf16>
    %c0_1 = arith.constant 0 : index
    %c0_2 = arith.constant 0 : index
    %1 = vector.load %arg3[%c0_1, %c0_2] : memref<32x128xbf16, #tpu.memory_space<vmem>>, vector<32x128xbf16>
    %cst = arith.constant dense<0.000000e+00> : vector<64x128xf32>
    %2 = tpu.matmul %0, %1, %cst {dimension_numbers = #tpu.dot_dimension_numbers<[1], [0], [0], [1], [0, 0, 1, 1], [], []>} : vector<64x32xbf16>, vector<32x128xbf16>, vector<64x128xf32> -> vector<64x128xf32>
    %c0_3 = arith.constant 0 : index
    %c0_4 = arith.constant 0 : index
    %3 = vector.load %arg4[%c0_3, %c0_4] : memref<1x128xf32, #tpu.memory_space<vmem>>, vector<1x128xf32>
    %4 = vector.broadcast %3 : vector<1x128xf32> to vector<64x128xf32>
    %5 = arith.addf %2, %4 : vector<64x128xf32>
    %cst_5 = arith.constant 0.000000e+00 : f32
    %6 = vector.broadcast %cst_5 : f32 to vector<64x128xf32>
    %7 = arith.maximumf %5, %6 : vector<64x128xf32>
    %8 = arith.truncf %7 : vector<64x128xf32> to vector<64x128xbf16>
    %c0_6 = arith.constant 0 : index
    %c0_7 = arith.constant 0 : index
    %9 = vector.load %arg5[%c0_6, %c0_7] : memref<128x256xbf16, #tpu.memory_space<vmem>>, vector<128x256xbf16>
    %cst_8 = arith.constant dense<0.000000e+00> : vector<64x256xf32>
    %10 = tpu.matmul %8, %9, %cst_8 {dimension_numbers = #tpu.dot_dimension_numbers<[1], [0], [0], [1], [0, 0, 1, 1], [], []>} : vector<64x128xbf16>, vector<128x256xbf16>, vector<64x256xf32> -> vector<64x256xf32>
    %c0_9 = arith.constant 0 : index
    %c0_10 = arith.constant 0 : index
    %11 = vector.load %arg6[%c0_9, %c0_10] : memref<1x256xf32, #tpu.memory_space<vmem>>, vector<1x256xf32>
    %12 = vector.broadcast %11 : vector<1x256xf32> to vector<64x256xf32>
    %13 = arith.addf %10, %12 : vector<64x256xf32>
    %cst_11 = arith.constant -15.9423847 : f32
    %cst_12 = arith.constant 15.9423847 : f32
    %14 = vector.broadcast %cst_11 : f32 to vector<64x256xf32>
    %15 = arith.maximumf %14, %13 : vector<64x256xf32>
    %16 = vector.broadcast %cst_12 : f32 to vector<64x256xf32>
    %17 = arith.minimumf %16, %15 : vector<64x256xf32>
    %cst_13 = arith.constant 0.000000e+00 : f32
    %18 = vector.broadcast %cst_13 : f32 to vector<64x256xf32>
    %19 = arith.maximumf %17, %18 : vector<64x256xf32>
    %20 = math.absf %17 : vector<64x256xf32>
    %cst_14 = arith.constant 0.000000e+00 : f32
    %21 = vector.broadcast %cst_14 : f32 to vector<64x256xf32>
    %22 = arith.subf %21, %20 : vector<64x256xf32>
    %23 = math.exp %22 : vector<64x256xf32>
    %24 = math.log1p %23 : vector<64x256xf32>
    %25 = arith.addf %19, %24 : vector<64x256xf32>
    %26 = arith.subf %17, %25 : vector<64x256xf32>
    %27 = math.exp %26 : vector<64x256xf32>
    %28 = arith.truncf %27 : vector<64x256xf32> to vector<64x256xbf16>
    %c0_15 = arith.constant 0 : index
    %c0_16 = arith.constant 0 : index
    %29 = vector.load %arg7[%c0_15, %c0_16] : memref<64x256xbf16, #tpu.memory_space<vmem>>, vector<64x256xbf16>
    tpu.vector_store %arg7[%c0_15, %c0_16], %28 {strides = array<i32>} : memref<64x256xbf16, #tpu.memory_space<vmem>>, vector<64x256xbf16>,
    %c0_17 = arith.constant 0 : index
    %c0_18 = arith.constant 0 : index
    %30 = vector.load %arg2[%c0_17, %c0_18] : memref<64x256xbf16, #tpu.memory_space<vmem>>, vector<64x256xbf16>
    %31 = arith.extf %30 : vector<64x256xbf16> to vector<64x256xf32>
    %32 = arith.mulf %31, %17 : vector<64x256xf32>
    %33 = arith.subf %25, %32 : vector<64x256xf32>
    %c0_19 = arith.constant 0 : index
    %c0_20 = arith.constant 0 : index
    %34 = vector.load %arg8[%c0_19, %c0_20] : memref<64x256xf32, #tpu.memory_space<vmem>>, vector<64x256xf32>
    tpu.vector_store %arg8[%c0_19, %c0_20], %33 {strides = array<i32>} : memref<64x256xf32, #tpu.memory_space<vmem>>, vector<64x256xf32>,
    return
  }
  func.func @transform_0(%arg0: i32) -> (i32, i32) {
    %c0_i32 = arith.constant 0 : i32
    %c0_i32_0 = arith.constant 0 : i32
    return %arg0, %c0_i32 : i32, i32
  }
  func.func @transform_1(%arg0: i32) -> (i32, i32) {
    %c0_i32 = arith.constant 0 : i32
    %c0_i32_0 = arith.constant 0 : i32
    return %arg0, %c0_i32 : i32, i32
  }
  func.func @transform_2(%arg0: i32) -> (i32, i32) {
    %c0_i32 = arith.constant 0 : i32
    %c0_i32_0 = arith.constant 0 : i32
    %c0_i32_1 = arith.constant 0 : i32
    return %c0_i32, %c0_i32_0 : i32, i32
  }
  func.func @transform_3(%arg0: i32) -> (i32, i32) {
    %c0_i32 = arith.constant 0 : i32
    %c0_i32_0 = arith.constant 0 : i32
    %c0_i32_1 = arith.constant 0 : i32
    return %c0_i32, %c0_i32_0 : i32, i32
  }
  func.func @transform_4(%arg0: i32) -> (i32, i32) {
    %c0_i32 = arith.constant 0 : i32
    %c0_i32_0 = arith.constant 0 : i32
    %c0_i32_1 = arith.constant 0 : i32
    return %c0_i32, %c0_i32_0 : i32, i32
  }
  func.func @transform_5(%arg0: i32) -> (i32, i32) {
    %c0_i32 = arith.constant 0 : i32
    %c0_i32_0 = arith.constant 0 : i32
    %c0_i32_1 = arith.constant 0 : i32
    return %c0_i32, %c0_i32_0 : i32, i32
  }
  func.func @transform_6(%arg0: i32) -> (i32, i32) {
    %c0_i32 = arith.constant 0 : i32
    %c0_i32_0 = arith.constant 0 : i32
    return %arg0, %c0_i32 : i32, i32
  }
  func.func @transform_7(%arg0: i32) -> (i32, i32) {
    %c0_i32 = arith.constant 0 : i32
    %c0_i32_0 = arith.constant 0 : i32
    return %arg0, %c0_i32 : i32, i32
  }
}

</mosaic_0001>

<llo_original>
// kernel: tpu_custom_call.1
$region0: #{tpu_custom_call.1}
  #allocation0 [shape = 'u32[]', space=smem, size = 0x4, offset = 0x4, fixed_abs, tag = 'smem constant byte address 0x4 - core index']
  #allocation1 [shape = 'u32[144,128]{1,0:T(1,128)}', space=vmem, size = 0x12000, scoped, tag = 'internal scratch']
  %s0 = inlined_call_operand.vmem [shape: bf16[64,32], index: 0, kind: input, shape index: {}]
  %s1 = inlined_call_operand.hbm [shape: bf16[64,256], index: 1, kind: input, shape index: {}]
  %s2 = inlined_call_operand.vmem [shape: bf16[32,128], index: 2, kind: input, shape index: {}]
  %s3 = inlined_call_operand.vmem [shape: f32[1,128], index: 3, kind: input, shape index: {}]
  %s4 = inlined_call_operand.hbm [shape: bf16[128,256], index: 4, kind: input, shape index: {}]
  %s5 = inlined_call_operand.vmem [shape: f32[1,256], index: 5, kind: input, shape index: {}]
  %s6 = inlined_call_operand.hbm [shape: bf16[64,256], index: 6, kind: output, shape index: {0}]
  %s7 = inlined_call_operand.hbm [shape: f32[64,256], index: 7, kind: output, shape index: {1}]
  %8 = xla_tuple %s6, %s7
  %s9 = sld [smem:[#allocation0]]
  $region50: #{tpu_custom_call.1} parent=0
    _
  %s11 = ssub.s32 1, %s9
  %s12 = scalar_select 0, %s11, %s9
  $region1: #{tpu_custom_call.1} parent=0
    #allocation2 [shape = 'u8[32768]{0}', space=vmem, size = 0x8000, scoped, tag = 'input window, operand 1, single buffered']
    #allocation3 [shape = 's32[1]{0}', space=sflag, size = 0x4, scoped, tag = 'scoped memory for tpu_custom_call.1']
    #allocation4 [shape = 's32[1]{0}', space=sflag, size = 0x4, scoped, tag = 'scoped memory for tpu_custom_call.1']
    #allocation5 [shape = 'u8[65536]{0}', space=vmem, size = 0x10000, scoped, tag = 'input window, operand 4, single buffered']
    #allocation6 [shape = 's32[1]{0}', space=sflag, size = 0x4, scoped, tag = 'scoped memory for tpu_custom_call.1']
    #allocation7 [shape = 'u8[32768]{0}', space=vmem, size = 0x8000, scoped, tag = 'output window, operand 0, single buffered']
    #allocation8 [shape = 'u8[65536]{0}', space=vmem, size = 0x10000, scoped, tag = 'output window, operand 1, single buffered']
    #allocation9 [shape = 's32[1]{0}', space=sflag, size = 0x4, scoped, tag = 'scoped memory for tpu_custom_call.1']
    %13 = vsyncpa [#allocation3], 0
    %14 = vsyncpa [#allocation6], 0
    %15 = vsyncpa [#allocation4], 0
    %16 = vsyncpa [#allocation9], 0
    // Predicated region
    $region2: #{tpu_custom_call.1} parent=1 // pred_check
      _
    $region3: #{tpu_custom_call.1} parent=1 // pred_check_branch
      %18 = sbr.rel (0) target = $region5
    $region4: #{tpu_custom_call.1} parent=1 // pred_region
      _
    $region5: #{tpu_custom_call.1} parent=1 // pred_fallthru
      _
    // Predicated region
    $region6: #{tpu_custom_call.1} parent=1 // pred_check
      _
    $region7: #{tpu_custom_call.1} parent=1 // pred_check_branch
      %20 = sbr.rel (0) target = $region9
    $region8: #{tpu_custom_call.1} parent=1 // pred_region
      %s22 = ssub.s32 1024, 1024
      %23 = vsyncadd [#allocation3], %s22
      %s24 = sshll.u32 [#allocation2], 4
      %s25 = int_to_ptr.vmem [resolvable:$true] %s24
      %30 = dma.hbm_to_vmem [thread:$0]  %s1, 1024, %s25, [#allocation3], 128, 128, 8
    $region9: #{tpu_custom_call.1} parent=1 // pred_fallthru
      _
    // Predicated region
    $region10: #{tpu_custom_call.1} parent=1 // pred_check
      _
    $region11: #{tpu_custom_call.1} parent=1 // pred_check_branch
      %32 = sbr.rel (0) target = $region13
    $region12: #{tpu_custom_call.1} parent=1 // pred_region
      _
    $region13: #{tpu_custom_call.1} parent=1 // pred_fallthru
      _
    // Predicated region
    $region14: #{tpu_custom_call.1} parent=1 // pred_check
      _
    $region15: #{tpu_custom_call.1} parent=1 // pred_check_branch
      %34 = sbr.rel (0) target = $region17
    $region16: #{tpu_custom_call.1} parent=1 // pred_region
      _
    $region17: #{tpu_custom_call.1} parent=1 // pred_fallthru
      _
    // Predicated region
    $region18: #{tpu_custom_call.1} parent=1 // pred_check
      _
    $region19: #{tpu_custom_call.1} parent=1 // pred_check_branch
      %36 = sbr.rel (0) target = $region21
    $region20: #{tpu_custom_call.1} parent=1 // pred_region
      %s38 = ssub.s32 2048, 2048
      %39 = vsyncadd [#allocation6], %s38
      %s40 = sshll.u32 [#allocation5], 4
      %s41 = int_to_ptr.vmem [resolvable:$true] %s40
      %46 = dma.hbm_to_vmem [thread:$0]  %s4, 2048, %s41, [#allocation6], 128, 128, 8
    $region21: #{tpu_custom_call.1} parent=1 // pred_fallthru
      _
    // Predicated region
    $region22: #{tpu_custom_call.1} parent=1 // pred_check
      _
    $region23: #{tpu_custom_call.1} parent=1 // pred_check_branch
      %48 = sbr.rel (0) target = $region25
    $region24: #{tpu_custom_call.1} parent=1 // pred_region
      _
    $region25: #{tpu_custom_call.1} parent=1 // pred_fallthru
      _
    // Predicated region
    $region26: #{tpu_custom_call.1} parent=1 // pred_check
      _
    $region27: #{tpu_custom_call.1} parent=1 // pred_check_branch
      %50 = sbr.rel (0) target = $region29
    $region28: #{tpu_custom_call.1} parent=1 // pred_region
      %51 = dma.done [#allocation3], 1024
    $region29: #{tpu_custom_call.1} parent=1 // pred_fallthru
      _
    // Predicated region
    $region30: #{tpu_custom_call.1} parent=1 // pred_check
      _
    $region31: #{tpu_custom_call.1} parent=1 // pred_check_branch
      %53 = sbr.rel (0) target = $region33
    $region32: #{tpu_custom_call.1} parent=1 // pred_region
      %54 = dma.done [#allocation6], 2048
    $region33: #{tpu_custom_call.1} parent=1 // pred_fallthru
      _
    %v56 = vld [vmem:[%s0] sm:$0xf]
    %v57 = vld [vmem:[%s0 + $0x4] sm:$0xf]
    %v58 = vld [vmem:[%s0 + $0x8] sm:$0xf]
    %v59 = vld [vmem:[%s0 + $0xc] sm:$0xf]
    %v60 = vld [vmem:[%s0 + $0x10] sm:$0xf]
    %v61 = vld [vmem:[%s0 + $0x14] sm:$0xf]
    %v62 = vld [vmem:[%s0 + $0x18] sm:$0xf]
    %v63 = vld [vmem:[%s0 + $0x1c] sm:$0xf]
    %v64 = vld [vmem:[%s2] sm:$0xf]
    %v65 = vld [vmem:[%s2 + $0x4] sm:$0xf]
    %v66 = vld [vmem:[%s2 + $0x8] sm:$0xf]
    %v67 = vld [vmem:[%s2 + $0xc] sm:$0xf]
    %v68 = vld [vmem:[%s3] sm:$0x1]
    %v70 = vlaneseq
    %v71 = vshrl.u32 %v70, 7
    %v72 = vsub.s32 0, %v71
    %v73 = vrot.slane %v68, %v72
    %v83 = vunpack.c.l.b16 %v56
    %v84 = vunpack.c.l.b16 %v57
    %v85 = vunpack.c.l.b16 %v58
    %v86 = vunpack.c.l.b16 %v59
    %v87 = vunpack.c.l.b16 %v60
    %v88 = vunpack.c.l.b16 %v61
    %v89 = vunpack.c.l.b16 %v62
    %v90 = vunpack.c.l.b16 %v63
    %v91 = vpack.c.b16 %v84, %v83
    %v92 = vpack.c.b16 %v86, %v85
    %v93 = vpack.c.b16 %v88, %v87
    %v94 = vpack.c.b16 %v90, %v89
    %v99 = vunpack.c.l.b16 %v64
    %v100 = vunpack.c.l.b16 %v65
    %v101 = vunpack.c.l.b16 %v66
    %v102 = vunpack.c.l.b16 %v67
    %v103 = vpack.c.b16 %v100, %v99
    %v104 = vpack.c.b16 %v102, %v101
    %vm107 = vcmask 261120
    %v109 = vsel %vm107, %v91, 0
    %v112 = vsel %vm107, %v92, 0
    %v115 = vsel %vm107, %v93, 0
    %v118 = vsel %vm107, %v94, 0
    %120 = vmatprep.subr.bf16.mxu0 0
    %121 = vmatpush1.bf16.msra.mxu0 %v103
    %122 = vmatprep.subr.bf16.mxu0 0
    %123 = vmatpush1.bf16.msra.mxu0 %v104
    %124 = vmatprep.subr.bf16.mxu0 0
    %125 = vmatpush1.bf16.msra.mxu0 0
    %126 = vmatprep.subr.bf16.mxu0 0
    %127 = vmatpush1.bf16.msra.mxu0 0
    %128 = vmatprep.subr.bf16.mxu0 0
    %129 = vmatpush1.bf16.msra.mxu0 0
    %130 = vmatprep.subr.bf16.mxu0 0
    %131 = vmatpush1.bf16.msra.mxu0 0
    %132 = vmatprep.subr.bf16.mxu0 0
    %133 = vmatpush1.bf16.msra.mxu0 0
    %134 = vmatprep.subr.bf16.mxu0 0
    %135 = vmatpush1.bf16.msra.mxu0 0
    %136 = vmatprep.subr.bf16.mxu0 0
    %137 = vmatpush1.bf16.msra.mxu0 0
    %138 = vmatprep.subr.bf16.mxu0 0
    %139 = vmatpush1.bf16.msra.mxu0 0
    %140 = vmatprep.subr.bf16.mxu0 0
    %141 = vmatpush1.bf16.msra.mxu0 0
    %142 = vmatprep.subr.bf16.mxu0 0
    %143 = vmatpush1.bf16.msra.mxu0 0
    %144 = vmatprep.subr.bf16.mxu0 0
    %145 = vmatpush1.bf16.msra.mxu0 0
    %146 = vmatprep.subr.bf16.mxu0 0
    %147 = vmatpush1.bf16.msra.mxu0 0
    %148 = vmatprep.subr.bf16.mxu0 0
    %149 = vmatpush1.bf16.msra.mxu0 0
    %150 = vmatprep.subr.bf16.mxu0 0
    %151 = vmatpush1.bf16.msra.mxu0 0
    %152 = vmatprep.mubr.bf16.mxu0 0
    %153 = vmatmul.mubr.bf16.gmra.mrb[0].mxu0 %v109
    %v154 = vpop.f32.mrb[0].mxu0
    %v155 = vadd.f32 %v73, %v154
    %v156 = vpop.f32.mrb[0].mxu0
    %v157 = vpop.f32.mrb[0].mxu0
    %v158 = vadd.f32 %v73, %v157
    %v159 = vpop.f32.mrb[0].mxu0
    %160 = vmatprep.mubr.bf16.mxu0 0
    %161 = vmatmul.mubr.bf16.gmra.mrb[0].mxu0 %v112
    %v162 = vpop.f32.mrb[0].mxu0
    %v163 = vadd.f32 %v73, %v162
    %v164 = vpop.f32.mrb[0].mxu0
    %v165 = vpop.f32.mrb[0].mxu0
    %v166 = vadd.f32 %v73, %v165
    %v167 = vpop.f32.mrb[0].mxu0
    %168 = vmatprep.mubr.bf16.mxu0 0
    %169 = vmatmul.mubr.bf16.gmra.mrb[0].mxu0 %v115
    %v170 = vpop.f32.mrb[0].mxu0
    %v171 = vadd.f32 %v73, %v170
    %v172 = vpop.f32.mrb[0].mxu0
    %v173 = vpop.f32.mrb[0].mxu0
    %v174 = vadd.f32 %v73, %v173
    %v175 = vpop.f32.mrb[0].mxu0
    %176 = vmatprep.mubr.bf16.mxu0 0
    %177 = vmatmul.mubr.bf16.gmra.mrb[0].mxu0 %v118
    %v178 = vpop.f32.mrb[0].mxu0
    %v179 = vadd.f32 %v73, %v178
    %v180 = vpop.f32.mrb[0].mxu0
    %v181 = vpop.f32.mrb[0].mxu0
    %v182 = vadd.f32 %v73, %v181
    %v183 = vpop.f32.mrb[0].mxu0
    %184 = vdwg.mxu0
    %v185 = vmax.f32 %v155, 0.0
    %v186 = vmax.f32 %v158, 0.0
    %v187 = vmax.f32 %v163, 0.0
    %v188 = vmax.f32 %v166, 0.0
    %v189 = vmax.f32 %v171, 0.0
    %v190 = vmax.f32 %v174, 0.0
    %v191 = vmax.f32 %v179, 0.0
    %v192 = vmax.f32 %v182, 0.0
    %v193 = vpack.c.bf16 %v186, %v185
    %v194 = vpack.c.bf16 %v188, %v187
    %v195 = vpack.c.bf16 %v190, %v189
    %v196 = vpack.c.bf16 %v192, %v191
    %v197 = vld [vmem:[#allocation5] sm:$0xff]
    %v198 = vld [vmem:[#allocation5 + $0x8] sm:$0xff]
    %v199 = vld [vmem:[#allocation5 + $0x10] sm:$0xff]
    %v200 = vld [vmem:[#allocation5 + $0x18] sm:$0xff]
    %v201 = vld [vmem:[#allocation5 + $0x20] sm:$0xff]
    %v202 = vld [vmem:[#allocation5 + $0x28] sm:$0xff]
    %v203 = vld [vmem:[#allocation5 + $0x30] sm:$0xff]
    %v204 = vld [vmem:[#allocation5 + $0x38] sm:$0xff]
    %v205 = vld [vmem:[#allocation5 + $0x40] sm:$0xff]
    %v206 = vld [vmem:[#allocation5 + $0x48] sm:$0xff]
    %v207 = vld [vmem:[#allocation5 + $0x50] sm:$0xff]
    %v208 = vld [vmem:[#allocation5 + $0x58] sm:$0xff]
    %v209 = vld [vmem:[#allocation5 + $0x60] sm:$0xff]
    %v210 = vld [vmem:[#allocation5 + $0x68] sm:$0xff]
    %v211 = vld [vmem:[#allocation5 + $0x70] sm:$0xff]
    %v212 = vld [vmem:[#allocation5 + $0x78] sm:$0xff]
    %v213 = vld [vmem:[%s5] sm:$0x3]
    %v215 = vlaneseq
    %v216 = vshrl.u32 %v215, 7
    %v217 = vsub.s32 0, %v216
    %v218 = vrot.slane %v213, %v217
    %v219 = vlaneseq
    %v220 = vshrl.u32 %v219, 7
    %v221 = vsub.s32 1, %v220
    %v222 = vrot.slane %v213, %v221
    %v241 = vunpack.c.l.b16 %v197
    %v242 = vunpack.c.h.b16 %v197
    %v243 = vunpack.c.l.b16 %v198
    %v244 = vunpack.c.h.b16 %v198
    %v245 = vunpack.c.l.b16 %v199
    %v246 = vunpack.c.h.b16 %v199
    %v247 = vunpack.c.l.b16 %v200
    %v248 = vunpack.c.h.b16 %v200
    %v249 = vunpack.c.l.b16 %v201
    %v250 = vunpack.c.h.b16 %v201
    %v251 = vunpack.c.l.b16 %v202
    %v252 = vunpack.c.h.b16 %v202
    %v253 = vunpack.c.l.b16 %v203
    %v254 = vunpack.c.h.b16 %v203
    %v255 = vunpack.c.l.b16 %v204
    %v256 = vunpack.c.h.b16 %v204
    %v257 = vunpack.c.l.b16 %v205
    %v258 = vunpack.c.h.b16 %v205
    %v259 = vunpack.c.l.b16 %v206
    %v260 = vunpack.c.h.b16 %v206
    %v261 = vunpack.c.l.b16 %v207
    %v262 = vunpack.c.h.b16 %v207
    %v263 = vunpack.c.l.b16 %v208
    %v264 = vunpack.c.h.b16 %v208
    %v265 = vunpack.c.l.b16 %v209
    %v266 = vunpack.c.h.b16 %v209
    %v267 = vunpack.c.l.b16 %v210
    %v268 = vunpack.c.h.b16 %v210
    %v269 = vunpack.c.l.b16 %v211
    %v270 = vunpack.c.h.b16 %v211
    %v271 = vunpack.c.l.b16 %v212
    %v272 = vunpack.c.h.b16 %v212
    %v273 = vpack.c.b16 %v243, %v241
    %v274 = vpack.c.b16 %v244, %v242
    %v275 = vpack.c.b16 %v247, %v245
    %v276 = vpack.c.b16 %v248, %v246
    %v277 = vpack.c.b16 %v251, %v249
    %v278 = vpack.c.b16 %v252, %v250
    %v279 = vpack.c.b16 %v255, %v253
    %v280 = vpack.c.b16 %v256, %v254
    %v281 = vpack.c.b16 %v259, %v257
    %v282 = vpack.c.b16 %v260, %v258
    %v283 = vpack.c.b16 %v263, %v261
    %v284 = vpack.c.b16 %v264, %v262
    %v285 = vpack.c.b16 %v267, %v265
    %v286 = vpack.c.b16 %v268, %v266
    %v287 = vpack.c.b16 %v271, %v269
    %v288 = vpack.c.b16 %v272, %v270
    %305 = vmatprep.subr.bf16.mxu0 %v274
    %306 = vmatpush1.bf16.msra.mxu0 %v273
    %307 = vmatprep.subr.bf16.mxu0 %v276
    %308 = vmatpush1.bf16.msra.mxu0 %v275
    %309 = vmatprep.subr.bf16.mxu0 %v278
    %310 = vmatpush1.bf16.msra.mxu0 %v277
    %311 = vmatprep.subr.bf16.mxu0 %v280
    %312 = vmatpush1.bf16.msra.mxu0 %v279
    %313 = vmatprep.subr.bf16.mxu0 %v282
    %314 = vmatpush1.bf16.msra.mxu0 %v281
    %315 = vmatprep.subr.bf16.mxu0 %v284
    %316 = vmatpush1.bf16.msra.mxu0 %v283
    %317 = vmatprep.subr.bf16.mxu0 %v286
    %318 = vmatpush1.bf16.msra.mxu0 %v285
    %319 = vmatprep.subr.bf16.mxu0 %v288
    %320 = vmatpush1.bf16.msra.mxu0 %v287
    %321 = vmatprep.subr.bf16.mxu0 0
    %322 = vmatpush1.bf16.msra.mxu0 0
    %323 = vmatprep.subr.bf16.mxu0 0
    %324 = vmatpush1.bf16.msra.mxu0 0
    %325 = vmatprep.subr.bf16.mxu0 0
    %326 = vmatpush1.bf16.msra.mxu0 0
    %327 = vmatprep.subr.bf16.mxu0 0
    %328 = vmatpush1.bf16.msra.mxu0 0
    %329 = vmatprep.subr.bf16.mxu0 0
    %330 = vmatpush1.bf16.msra.mxu0 0
    %331 = vmatprep.subr.bf16.mxu0 0
    %332 = vmatpush1.bf16.msra.mxu0 0
    %333 = vmatprep.subr.bf16.mxu0 0
    %334 = vmatpush1.bf16.msra.mxu0 0
    %335 = vmatprep.subr.bf16.mxu0 0
    %336 = vmatpush1.bf16.msra.mxu0 0
    %337 = vmatprep.mubr.bf16.mxu0 0
    %338 = vmatmul.mubr.bf16.gmra.mrb[0].mxu0 %v193
    %v339 = vpop.f32.mrb[0].mxu0
    %v340 = vadd.f32 %v218, %v339
    %v341 = vpop.f32.mrb[0].mxu0
    %v342 = vadd.f32 %v222, %v341
    %v343 = vpop.f32.mrb[0].mxu0
    %v344 = vadd.f32 %v218, %v343
    %v345 = vpop.f32.mrb[0].mxu0
    %v346 = vadd.f32 %v222, %v345
    %347 = vmatprep.mubr.bf16.mxu0 0
    %348 = vmatmul.mubr.bf16.gmra.mrb[0].mxu0 %v194
    %v349 = vpop.f32.mrb[0].mxu0
    %v350 = vadd.f32 %v218, %v349
    %v351 = vpop.f32.mrb[0].mxu0
    %v352 = vadd.f32 %v222, %v351
    %v353 = vpop.f32.mrb[0].mxu0
    %v354 = vadd.f32 %v218, %v353
    %v355 = vpop.f32.mrb[0].mxu0
    %v356 = vadd.f32 %v222, %v355
    %357 = vmatprep.mubr.bf16.mxu0 0
    %358 = vmatmul.mubr.bf16.gmra.mrb[0].mxu0 %v195
    %v359 = vpop.f32.mrb[0].mxu0
    %v360 = vadd.f32 %v218, %v359
    %v361 = vpop.f32.mrb[0].mxu0
    %v362 = vadd.f32 %v222, %v361
    %v363 = vpop.f32.mrb[0].mxu0
    %v364 = vadd.f32 %v218, %v363
    %v365 = vpop.f32.mrb[0].mxu0
    %v366 = vadd.f32 %v222, %v365
    %367 = vmatprep.mubr.bf16.mxu0 0
    %368 = vmatmul.mubr.bf16.gmra.mrb[0].mxu0 %v196
    %v369 = vpop.f32.mrb[0].mxu0
    %v370 = vadd.f32 %v218, %v369
    %v371 = vpop.f32.mrb[0].mxu0
    %v372 = vadd.f32 %v222, %v371
    %v373 = vpop.f32.mrb[0].mxu0
    %v374 = vadd.f32 %v218, %v373
    %v375 = vpop.f32.mrb[0].mxu0
    %v376 = vadd.f32 %v222, %v375
    %377 = vdwg.mxu0
    %v378 = vmax.f32 %v340, -15.942385
    %v379 = vmax.f32 %v342, -15.942385
    %v380 = vmax.f32 %v344, -15.942385
    %v381 = vmax.f32 %v346, -15.942385
    %v382 = vmax.f32 %v350, -15.942385
    %v383 = vmax.f32 %v352, -15.942385
    %v384 = vmax.f32 %v354, -15.942385
    %v385 = vmax.f32 %v356, -15.942385
    %v386 = vmax.f32 %v360, -15.942385
    %v387 = vmax.f32 %v362, -15.942385
    %v388 = vmax.f32 %v364, -15.942385
    %v389 = vmax.f32 %v366, -15.942385
    %v390 = vmax.f32 %v370, -15.942385
    %v391 = vmax.f32 %v372, -15.942385
    %v392 = vmax.f32 %v374, -15.942385
    %v393 = vmax.f32 %v376, -15.942385
    %v394 = vmin.f32 %v378, 15.942385
    %v395 = vmin.f32 %v379, 15.942385
    %v396 = vmin.f32 %v380, 15.942385
    %v397 = vmin.f32 %v381, 15.942385
    %v398 = vmin.f32 %v382, 15.942385
    %v399 = vmin.f32 %v383, 15.942385
    %v400 = vmin.f32 %v384, 15.942385
    %v401 = vmin.f32 %v385, 15.942385
    %v402 = vmin.f32 %v386, 15.942385
    %v403 = vmin.f32 %v387, 15.942385
    %v404 = vmin.f32 %v388, 15.942385
    %v405 = vmin.f32 %v389, 15.942385
    %v406 = vmin.f32 %v390, 15.942385
    %v407 = vmin.f32 %v391, 15.942385
    %v408 = vmin.f32 %v392, 15.942385
    %v409 = vmin.f32 %v393, 15.942385
    %v410 = vmax.f32 %v394, 0.0
    %v411 = vmax.f32 %v395, 0.0
    %v412 = vmax.f32 %v396, 0.0
    %v413 = vmax.f32 %v397, 0.0
    %v414 = vmax.f32 %v398, 0.0
    %v415 = vmax.f32 %v399, 0.0
    %v416 = vmax.f32 %v400, 0.0
    %v417 = vmax.f32 %v401, 0.0
    %v418 = vmax.f32 %v402, 0.0
    %v419 = vmax.f32 %v403, 0.0
    %v420 = vmax.f32 %v404, 0.0
    %v421 = vmax.f32 %v405, 0.0
    %v422 = vmax.f32 %v406, 0.0
    %v423 = vmax.f32 %v407, 0.0
    %v424 = vmax.f32 %v408, 0.0
    %v425 = vmax.f32 %v409, 0.0
    %v426 = vand.u32 2147483647, %v394
    %v427 = vand.u32 2147483647, %v395
    %v428 = vand.u32 2147483647, %v396
    %v429 = vand.u32 2147483647, %v397
    %v430 = vand.u32 2147483647, %v398
    %v431 = vand.u32 2147483647, %v399
    %v432 = vand.u32 2147483647, %v400
    %v433 = vand.u32 2147483647, %v401
    %v434 = vand.u32 2147483647, %v402
    %v435 = vand.u32 2147483647, %v403
    %v436 = vand.u32 2147483647, %v404
    %v437 = vand.u32 2147483647, %v405
    %v438 = vand.u32 2147483647, %v406
    %v439 = vand.u32 2147483647, %v407
    %v440 = vand.u32 2147483647, %v408
    %v441 = vand.u32 2147483647, %v409
    %v442 = vsub.f32 0.0, %v426
    %v443 = vsub.f32 0.0, %v427
    %v444 = vsub.f32 0.0, %v428
    %v445 = vsub.f32 0.0, %v429
    %v446 = vsub.f32 0.0, %v430
    %v447 = vsub.f32 0.0, %v431
    %v448 = vsub.f32 0.0, %v432
    %v449 = vsub.f32 0.0, %v433
    %v450 = vsub.f32 0.0, %v434
    %v451 = vsub.f32 0.0, %v435
    %v452 = vsub.f32 0.0, %v436
    %v453 = vsub.f32 0.0, %v437
    %v454 = vsub.f32 0.0, %v438
    %v455 = vsub.f32 0.0, %v439
    %v456 = vsub.f32 0.0, %v440
    %v457 = vsub.f32 0.0, %v441
    %v458 = vmul.f32 %v442, 1.442695
    %v459 = vpow.pop %v458
    %v460 = vmul.f32 %v443, 1.442695
    %v461 = vpow.pop %v460
    %v462 = vmul.f32 %v444, 1.442695
    %v463 = vpow.pop %v462
    %v464 = vmul.f32 %v445, 1.442695
    %v465 = vpow.pop %v464
    %v466 = vmul.f32 %v446, 1.442695
    %v467 = vpow.pop %v466
    %v468 = vmul.f32 %v447, 1.442695
    %v469 = vpow.pop %v468
    %v470 = vmul.f32 %v448, 1.442695
    %v471 = vpow.pop %v470
    %v472 = vmul.f32 %v449, 1.442695
    %v473 = vpow.pop %v472
    %v474 = vmul.f32 %v450, 1.442695
    %v475 = vpow.pop %v474
    %v476 = vmul.f32 %v451, 1.442695
    %v477 = vpow.pop %v476
    %v478 = vmul.f32 %v452, 1.442695
    %v479 = vpow.pop %v478
    %v480 = vmul.f32 %v453, 1.442695
    %v481 = vpow.pop %v480
    %v482 = vmul.f32 %v454, 1.442695
    %v483 = vpow.pop %v482
    %v484 = vmul.f32 %v455, 1.442695
    %v485 = vpow.pop %v484
    %v486 = vmul.f32 %v456, 1.442695
    %v487 = vpow.pop %v486
    %v488 = vmul.f32 %v457, 1.442695
    %v489 = vpow.pop %v488
    %v490 = vadd.f32 %v459, 1.0
    %v491 = vlog2.pop %v490
    %v492 = vmul.f32 %v491, 0.6931472
    %v493 = vmul.f32 -0.5, %v459
    %v494 = vadd.f32 %v493, 1.0
    %v495 = vmul.f32 %v494, %v459
    %v496 = vand.u32 2147483647, %v459
    %vm497 = vcmp.lt.f32.partialorder %v496, 0.0004427343
    %v498 = vsel %vm497, %v495, %v492
    %v499 = vadd.f32 %v461, 1.0
    %v500 = vlog2.pop %v499
    %v501 = vmul.f32 %v500, 0.6931472
    %v502 = vmul.f32 -0.5, %v461
    %v503 = vadd.f32 %v502, 1.0
    %v504 = vmul.f32 %v503, %v461
    %v505 = vand.u32 2147483647, %v461
    %vm506 = vcmp.lt.f32.partialorder %v505, 0.0004427343
    %v507 = vsel %vm506, %v504, %v501
    %v508 = vadd.f32 %v463, 1.0
    %v509 = vlog2.pop %v508
    %v510 = vmul.f32 %v509, 0.6931472
    %v511 = vmul.f32 -0.5, %v463
    %v512 = vadd.f32 %v511, 1.0
    %v513 = vmul.f32 %v512, %v463
    %v514 = vand.u32 2147483647, %v463
    %vm515 = vcmp.lt.f32.partialorder %v514, 0.0004427343
    %v516 = vsel %vm515, %v513, %v510
    %v517 = vadd.f32 %v465, 1.0
    %v518 = vlog2.pop %v517
    %v519 = vmul.f32 %v518, 0.6931472
    %v520 = vmul.f32 -0.5, %v465
    %v521 = vadd.f32 %v520, 1.0
    %v522 = vmul.f32 %v521, %v465
    %v523 = vand.u32 2147483647, %v465
    %vm524 = vcmp.lt.f32.partialorder %v523, 0.0004427343
    %v525 = vsel %vm524, %v522, %v519
    %v526 = vadd.f32 %v467, 1.0
    %v527 = vlog2.pop %v526
    %v528 = vmul.f32 %v527, 0.6931472
    %v529 = vmul.f32 -0.5, %v467
    %v530 = vadd.f32 %v529, 1.0
    %v531 = vmul.f32 %v530, %v467
    %v532 = vand.u32 2147483647, %v467
    %vm533 = vcmp.lt.f32.partialorder %v532, 0.0004427343
    %v534 = vsel %vm533, %v531, %v528
    %v535 = vadd.f32 %v469, 1.0
    %v536 = vlog2.pop %v535
    %v537 = vmul.f32 %v536, 0.6931472
    %v538 = vmul.f32 -0.5, %v469
    %v539 = vadd.f32 %v538, 1.0
    %v540 = vmul.f32 %v539, %v469
    %v541 = vand.u32 2147483647, %v469
    %vm542 = vcmp.lt.f32.partialorder %v541, 0.0004427343
    %v543 = vsel %vm542, %v540, %v537
    %v544 = vadd.f32 %v471, 1.0
    %v545 = vlog2.pop %v544
    %v546 = vmul.f32 %v545, 0.6931472
    %v547 = vmul.f32 -0.5, %v471
    %v548 = vadd.f32 %v547, 1.0
    %v549 = vmul.f32 %v548, %v471
    %v550 = vand.u32 2147483647, %v471
    %vm551 = vcmp.lt.f32.partialorder %v550, 0.0004427343
    %v552 = vsel %vm551, %v549, %v546
    %v553 = vadd.f32 %v473, 1.0
    %v554 = vlog2.pop %v553
    %v555 = vmul.f32 %v554, 0.6931472
    %v556 = vmul.f32 -0.5, %v473
    %v557 = vadd.f32 %v556, 1.0
    %v558 = vmul.f32 %v557, %v473
    %v559 = vand.u32 2147483647, %v473
    %vm560 = vcmp.lt.f32.partialorder %v559, 0.0004427343
    %v561 = vsel %vm560, %v558, %v555
    %v562 = vadd.f32 %v475, 1.0
    %v563 = vlog2.pop %v562
    %v564 = vmul.f32 %v563, 0.6931472
    %v565 = vmul.f32 -0.5, %v475
    %v566 = vadd.f32 %v565, 1.0
    %v567 = vmul.f32 %v566, %v475
    %v568 = vand.u32 2147483647, %v475
    %vm569 = vcmp.lt.f32.partialorder %v568, 0.0004427343
    %v570 = vsel %vm569, %v567, %v564
    %v571 = vadd.f32 %v477, 1.0
    %v572 = vlog2.pop %v571
    %v573 = vmul.f32 %v572, 0.6931472
    %v574 = vmul.f32 -0.5, %v477
    %v575 = vadd.f32 %v574, 1.0
    %v576 = vmul.f32 %v575, %v477
    %v577 = vand.u32 2147483647, %v477
    %vm578 = vcmp.lt.f32.partialorder %v577, 0.0004427343
    %v579 = vsel %vm578, %v576, %v573
    %v580 = vadd.f32 %v479, 1.0
    %v581 = vlog2.pop %v580
    %v582 = vmul.f32 %v581, 0.6931472
    %v583 = vmul.f32 -0.5, %v479
    %v584 = vadd.f32 %v583, 1.0
    %v585 = vmul.f32 %v584, %v479
    %v586 = vand.u32 2147483647, %v479
    %vm587 = vcmp.lt.f32.partialorder %v586, 0.0004427343
    %v588 = vsel %vm587, %v585, %v582
    %v589 = vadd.f32 %v481, 1.0
    %v590 = vlog2.pop %v589
    %v591 = vmul.f32 %v590, 0.6931472
    %v592 = vmul.f32 -0.5, %v481
    %v593 = vadd.f32 %v592, 1.0
    %v594 = vmul.f32 %v593, %v481
    %v595 = vand.u32 2147483647, %v481
    %vm596 = vcmp.lt.f32.partialorder %v595, 0.0004427343
    %v597 = vsel %vm596, %v594, %v591
    %v598 = vadd.f32 %v483, 1.0
    %v599 = vlog2.pop %v598
    %v600 = vmul.f32 %v599, 0.6931472
    %v601 = vmul.f32 -0.5, %v483
    %v602 = vadd.f32 %v601, 1.0
    %v603 = vmul.f32 %v602, %v483
    %v604 = vand.u32 2147483647, %v483
    %vm605 = vcmp.lt.f32.partialorder %v604, 0.0004427343
    %v606 = vsel %vm605, %v603, %v600
    %v607 = vadd.f32 %v485, 1.0
    %v608 = vlog2.pop %v607
    %v609 = vmul.f32 %v608, 0.6931472
    %v610 = vmul.f32 -0.5, %v485
    %v611 = vadd.f32 %v610, 1.0
    %v612 = vmul.f32 %v611, %v485
    %v613 = vand.u32 2147483647, %v485
    %vm614 = vcmp.lt.f32.partialorder %v613, 0.0004427343
    %v615 = vsel %vm614, %v612, %v609
    %v616 = vadd.f32 %v487, 1.0
    %v617 = vlog2.pop %v616
    %v618 = vmul.f32 %v617, 0.6931472
    %v619 = vmul.f32 -0.5, %v487
    %v620 = vadd.f32 %v619, 1.0
    %v621 = vmul.f32 %v620, %v487
    %v622 = vand.u32 2147483647, %v487
    %vm623 = vcmp.lt.f32.partialorder %v622, 0.0004427343
    %v624 = vsel %vm623, %v621, %v618
    %v625 = vadd.f32 %v489, 1.0
    %v626 = vlog2.pop %v625
    %v627 = vmul.f32 %v626, 0.6931472
    %v628 = vmul.f32 -0.5, %v489
    %v629 = vadd.f32 %v628, 1.0
    %v630 = vmul.f32 %v629, %v489
    %v631 = vand.u32 2147483647, %v489
    %vm632 = vcmp.lt.f32.partialorder %v631, 0.0004427343
    %v633 = vsel %vm632, %v630, %v627
    %v634 = vadd.f32 %v410, %v498
    %v635 = vadd.f32 %v411, %v507
    %v636 = vadd.f32 %v412, %v516
    %v637 = vadd.f32 %v413, %v525
    %v638 = vadd.f32 %v414, %v534
    %v639 = vadd.f32 %v415, %v543
    %v640 = vadd.f32 %v416, %v552
    %v641 = vadd.f32 %v417, %v561
    %v642 = vadd.f32 %v418, %v570
    %v643 = vadd.f32 %v419, %v579
    %v644 = vadd.f32 %v420, %v588
    %v645 = vadd.f32 %v421, %v597
    %v646 = vadd.f32 %v422, %v606
    %v647 = vadd.f32 %v423, %v615
    %v648 = vadd.f32 %v424, %v624
    %v649 = vadd.f32 %v425, %v633
    %v650 = vsub.f32 %v394, %v634
    %v651 = vsub.f32 %v395, %v635
    %v652 = vsub.f32 %v396, %v636
    %v653 = vsub.f32 %v397, %v637
    %v654 = vsub.f32 %v398, %v638
    %v655 = vsub.f32 %v399, %v639
    %v656 = vsub.f32 %v400, %v640
    %v657 = vsub.f32 %v401, %v641
    %v658 = vsub.f32 %v402, %v642
    %v659 = vsub.f32 %v403, %v643
    %v660 = vsub.f32 %v404, %v644
    %v661 = vsub.f32 %v405, %v645
    %v662 = vsub.f32 %v406, %v646
    %v663 = vsub.f32 %v407, %v647
    %v664 = vsub.f32 %v408, %v648
    %v665 = vsub.f32 %v409, %v649
    %v666 = vmul.f32 %v650, 1.442695
    %v667 = vpow.pop %v666
    %v668 = vmul.f32 %v651, 1.442695
    %v669 = vpow.pop %v668
    %v670 = vmul.f32 %v652, 1.442695
    %v671 = vpow.pop %v670
    %v672 = vmul.f32 %v653, 1.442695
    %v673 = vpow.pop %v672
    %v674 = vmul.f32 %v654, 1.442695
    %v675 = vpow.pop %v674
    %v676 = vmul.f32 %v655, 1.442695
    %v677 = vpow.pop %v676
    %v678 = vmul.f32 %v656, 1.442695
    %v679 = vpow.pop %v678
    %v680 = vmul.f32 %v657, 1.442695
    %v681 = vpow.pop %v680
    %v682 = vmul.f32 %v658, 1.442695
    %v683 = vpow.pop %v682
    %v684 = vmul.f32 %v659, 1.442695
    %v685 = vpow.pop %v684
    %v686 = vmul.f32 %v660, 1.442695
    %v687 = vpow.pop %v686
    %v688 = vmul.f32 %v661, 1.442695
    %v689 = vpow.pop %v688
    %v690 = vmul.f32 %v662, 1.442695
    %v691 = vpow.pop %v690
    %v692 = vmul.f32 %v663, 1.442695
    %v693 = vpow.pop %v692
    %v694 = vmul.f32 %v664, 1.442695
    %v695 = vpow.pop %v694
    %v696 = vmul.f32 %v665, 1.442695
    %v697 = vpow.pop %v696
    %v698 = vpack.c.bf16 %v671, %v667
    %v699 = vpack.c.bf16 %v673, %v669
    %v700 = vpack.c.bf16 %v679, %v675
    %v701 = vpack.c.bf16 %v681, %v677
    %v702 = vpack.c.bf16 %v687, %v683
    %v703 = vpack.c.bf16 %v689, %v685
    %v704 = vpack.c.bf16 %v695, %v691
    %v705 = vpack.c.bf16 %v697, %v693
    %v714 = vunpack.c.l.b16 %v698
    %v715 = vunpack.c.l.b16 %v699
    %v716 = vunpack.c.h.b16 %v698
    %v717 = vunpack.c.h.b16 %v699
    %v718 = vunpack.c.l.b16 %v700
    %v719 = vunpack.c.l.b16 %v701
    %v720 = vunpack.c.h.b16 %v700
    %v721 = vunpack.c.h.b16 %v701
    %v722 = vunpack.c.l.b16 %v702
    %v723 = vunpack.c.l.b16 %v703
    %v724 = vunpack.c.h.b16 %v702
    %v725 = vunpack.c.h.b16 %v703
    %v726 = vunpack.c.l.b16 %v704
    %v727 = vunpack.c.l.b16 %v705
    %v728 = vunpack.c.h.b16 %v704
    %v729 = vunpack.c.h.b16 %v705
    %v730 = vpack.c.b16 %v715, %v714
    %v731 = vpack.c.b16 %v717, %v716
    %v732 = vpack.c.b16 %v719, %v718
    %v733 = vpack.c.b16 %v721, %v720
    %v734 = vpack.c.b16 %v723, %v722
    %v735 = vpack.c.b16 %v725, %v724
    %v736 = vpack.c.b16 %v727, %v726
    %v737 = vpack.c.b16 %v729, %v728
    %746 = vst [vmem:[#allocation7] sm:$0xff] %v730
    %747 = vst [vmem:[#allocation7 + $0x8] sm:$0xff] %v731
    %748 = vst [vmem:[#allocation7 + $0x10] sm:$0xff] %v732
    %749 = vst [vmem:[#allocation7 + $0x18] sm:$0xff] %v733
    %750 = vst [vmem:[#allocation7 + $0x20] sm:$0xff] %v734
    %751 = vst [vmem:[#allocation7 + $0x28] sm:$0xff] %v735
    %752 = vst [vmem:[#allocation7 + $0x30] sm:$0xff] %v736
    %753 = vst [vmem:[#allocation7 + $0x38] sm:$0xff] %v737
    %v754 = vld [vmem:[#allocation2] sm:$0xff]
    %v755 = vld [vmem:[#allocation2 + $0x8] sm:$0xff]
    %v756 = vld [vmem:[#allocation2 + $0x10] sm:$0xff]
    %v757 = vld [vmem:[#allocation2 + $0x18] sm:$0xff]
    %v758 = vld [vmem:[#allocation2 + $0x20] sm:$0xff]
    %v759 = vld [vmem:[#allocation2 + $0x28] sm:$0xff]
    %v760 = vld [vmem:[#allocation2 + $0x30] sm:$0xff]
    %v761 = vld [vmem:[#allocation2 + $0x38] sm:$0xff]
    %v762 = vunpack.c.l.bf16 %v754
    %v763 = vunpack.c.h.bf16 %v754
    %v764 = vunpack.c.l.bf16 %v755
    %v765 = vunpack.c.h.bf16 %v755
    %v766 = vunpack.c.l.bf16 %v756
    %v767 = vunpack.c.h.bf16 %v756
    %v768 = vunpack.c.l.bf16 %v757
    %v769 = vunpack.c.h.bf16 %v757
    %v770 = vunpack.c.l.bf16 %v758
    %v771 = vunpack.c.h.bf16 %v758
    %v772 = vunpack.c.l.bf16 %v759
    %v773 = vunpack.c.h.bf16 %v759
    %v774 = vunpack.c.l.bf16 %v760
    %v775 = vunpack.c.h.bf16 %v760
    %v776 = vunpack.c.l.bf16 %v761
    %v777 = vunpack.c.h.bf16 %v761
    %v778 = vmul.f32 %v762, %v394
    %v779 = vmul.f32 %v763, %v395
    %v780 = vmul.f32 %v764, %v396
    %v781 = vmul.f32 %v765, %v397
    %v782 = vmul.f32 %v766, %v398
    %v783 = vmul.f32 %v767, %v399
    %v784 = vmul.f32 %v768, %v400
    %v785 = vmul.f32 %v769, %v401
    %v786 = vmul.f32 %v770, %v402
    %v787 = vmul.f32 %v771, %v403
    %v788 = vmul.f32 %v772, %v404
    %v789 = vmul.f32 %v773, %v405
    %v790 = vmul.f32 %v774, %v406
    %v791 = vmul.f32 %v775, %v407
    %v792 = vmul.f32 %v776, %v408
    %v793 = vmul.f32 %v777, %v409
    %v794 = vsub.f32 %v634, %v778
    %v795 = vsub.f32 %v635, %v779
    %v796 = vsub.f32 %v636, %v780
    %v797 = vsub.f32 %v637, %v781
    %v798 = vsub.f32 %v638, %v782
    %v799 = vsub.f32 %v639, %v783
    %v800 = vsub.f32 %v640, %v784
    %v801 = vsub.f32 %v641, %v785
    %v802 = vsub.f32 %v642, %v786
    %v803 = vsub.f32 %v643, %v787
    %v804 = vsub.f32 %v644, %v788
    %v805 = vsub.f32 %v645, %v789
    %v806 = vsub.f32 %v646, %v790
    %v807 = vsub.f32 %v647, %v791
    %v808 = vsub.f32 %v648, %v792
    %v809 = vsub.f32 %v649, %v793
    %810 = vst [vmem:[#allocation8] sm:$0xff] %v794
    %811 = vst [vmem:[#allocation8 + $0x8] sm:$0xff] %v795
    %812 = vst [vmem:[#allocation8 + $0x10] sm:$0xff] %v796
    %813 = vst [vmem:[#allocation8 + $0x18] sm:$0xff] %v797
    %814 = vst [vmem:[#allocation8 + $0x20] sm:$0xff] %v798
    %815 = vst [vmem:[#allocation8 + $0x28] sm:$0xff] %v799
    %816 = vst [vmem:[#allocation8 + $0x30] sm:$0xff] %v800
    %817 = vst [vmem:[#allocation8 + $0x38] sm:$0xff] %v801
    %818 = vst [vmem:[#allocation8 + $0x40] sm:$0xff] %v802
    %819 = vst [vmem:[#allocation8 + $0x48] sm:$0xff] %v803
    %820 = vst [vmem:[#allocation8 + $0x50] sm:$0xff] %v804
    %821 = vst [vmem:[#allocation8 + $0x58] sm:$0xff] %v805
    %822 = vst [vmem:[#allocation8 + $0x60] sm:$0xff] %v806
    %823 = vst [vmem:[#allocation8 + $0x68] sm:$0xff] %v807
    %824 = vst [vmem:[#allocation8 + $0x70] sm:$0xff] %v808
    %825 = vst [vmem:[#allocation8 + $0x78] sm:$0xff] %v809
    // Predicated region
    $region34: #{tpu_custom_call.1} parent=1 // pred_check
      _
    $region35: #{tpu_custom_call.1} parent=1 // pred_check_branch
      %827 = sbr.rel (0) target = $region37
    $region36: #{tpu_custom_call.1} parent=1 // pred_region
      %s829 = ssub.s32 1024, 1024
      %830 = vsyncadd [#allocation4], %s829
      %s831 = sshll.u32 [#allocation7], 4
      %s832 = int_to_ptr.vmem [resolvable:$true] %s831
      %837 = dma.vmem_to_hbm [thread:$0]  %s832, 1024, %s6, [#allocation4], 128, 128, 8
    $region37: #{tpu_custom_call.1} parent=1 // pred_fallthru
      _
    // Predicated region
    $region38: #{tpu_custom_call.1} parent=1 // pred_check
      _
    $region39: #{tpu_custom_call.1} parent=1 // pred_check_branch
      %839 = sbr.rel (0) target = $region41
    $region40: #{tpu_custom_call.1} parent=1 // pred_region
      %s841 = ssub.s32 2048, 2048
      %842 = vsyncadd [#allocation9], %s841
      %s843 = sshll.u32 [#allocation8], 4
      %s844 = int_to_ptr.vmem [resolvable:$true] %s843
      %849 = dma.vmem_to_hbm [thread:$0]  %s844, 2048, %s7, [#allocation9], 256, 256, 16
    $region41: #{tpu_custom_call.1} parent=1 // pred_fallthru
      _
    // Predicated region
    $region42: #{tpu_custom_call.1} parent=1 // pred_check
      _
    $region43: #{tpu_custom_call.1} parent=1 // pred_check_branch
      %851 = sbr.rel (0) target = $region45
    $region44: #{tpu_custom_call.1} parent=1 // pred_region
      %852 = dma.done [#allocation4], 1024
    $region45: #{tpu_custom_call.1} parent=1 // pred_fallthru
      _
    // Predicated region
    $region46: #{tpu_custom_call.1} parent=1 // pred_check
      _
    $region47: #{tpu_custom_call.1} parent=1 // pred_check_branch
      %854 = sbr.rel (0) target = $region49
    $region48: #{tpu_custom_call.1} parent=1 // pred_region
      %855 = dma.done [#allocation9], 2048
    $region49: #{tpu_custom_call.1} parent=1 // pred_fallthru
      _
    %856 = vsyncpa [#allocation3], 1
    %857 = vsyncpa [#allocation6], 1
    %858 = vsyncpa [#allocation4], 1
    %859 = vsyncpa [#allocation9], 1

</llo_original>
